<compile_context>
chip_gen: v7x
topology: tpu7x:2x2x1
jax: 0.10.0
libtpu: 0.0.40
codegen_flags: <defaults>
</compile_context>

<pallas_src>
import functools
import math

import jax
import jax.numpy as jnp
import numpy as np
from jax.experimental import pallas as pl
from jax.experimental.pallas import tpu as pltpu

_HALF_LOG_2PI = 0.5 * math.log(2.0 * math.pi)
_LOG_2 = math.log(2.0)


def _round_up(x: int, m: int) -> int:
    return (x + m - 1) // m * m


def _tanh_log_det(z):
    """log(1 - tanh(z)^2) == 2*(log 2 - z - softplus(-2z)), numerically stable.

    Matches torch.distributions.TanhTransform.log_abs_det_jacobian.
    """
    softplus_m2z = jnp.maximum(-2.0 * z, 0.0) + jnp.log(1.0 + jnp.exp(-2.0 * jnp.abs(z)))
    return 2.0 * (_LOG_2 - z - softplus_m2z)


def _forward_math(mean, log_std, eps, *, log_std_min, log_std_max,
                  deterministic, no_tanh):
    """Shared math for kernel body and pure-JAX reference.

    Returns (action, per-element log_prob). Flags are static Python bools.
    """
    log_std = jnp.clip(log_std, log_std_min, log_std_max)
    std = jnp.exp(log_std)
    if deterministic:
        # PyTorch takes tanh(mean) regardless of no_tanh.
        action = jnp.tanh(mean)
        if no_tanh:
            # Normal(mean, std).log_prob(tanh(mean))
            u = (action - mean) * jnp.exp(-log_std)
            lp = -0.5 * u * u - log_std - _HALF_LOG_2PI
        else:
            # pre-tanh value of tanh(mean) is mean -> Normal term has eps == 0
            lp = (-log_std - _HALF_LOG_2PI) - _tanh_log_det(mean)
    else:
        z = mean + std * eps
        base_lp = -0.5 * eps * eps - log_std - _HALF_LOG_2PI
        if no_tanh:
            action = z
            lp = base_lp
        else:
            action = jnp.tanh(z)
            lp = base_lp - _tanh_log_det(z)   # cache_size=1 semantics: reuse pre-tanh z
    return action, lp


# ---------------------------------------------------------------------------
# Pallas kernel
# ---------------------------------------------------------------------------
def _tanh_gaussian_kernel(mean_ref, log_std_ref, eps_ref, act_ref, lp_ref, *,
                          log_std_min, log_std_max, deterministic, no_tanh):
    action, lp_elem = _forward_math(
        mean_ref[...], log_std_ref[...], eps_ref[...],
        log_std_min=log_std_min, log_std_max=log_std_max,
        deterministic=deterministic, no_tanh=no_tanh)
    act_ref[...] = action
    lp_ref[...] = jnp.sum(lp_elem, axis=-1, keepdims=True)


# ---------------------------------------------------------------------------
# wrapper
# ---------------------------------------------------------------------------
def tanh_gaussian_forward(mean, log_std, eps=None, *, deterministic=False,
                          no_tanh=False, log_std_min=-20.0, log_std_max=2.0,
                          tile_rows=128):
    """ReparameterizedTanhGaussian.forward. Returns (action_sample, log_prob).

    `mean`/`log_std` have shape (..., A); `eps` (same shape) is the N(0,1) noise
    for the reparameterized sample (ignored when deterministic=True).
    """
    orig_shape = mean.shape
    a = int(orig_shape[-1])
    lead = orig_shape[:-1]
    n = int(np.prod(lead, dtype=np.int64)) if lead else 1

    mean2 = jnp.asarray(mean, jnp.float32).reshape(n, a)
    log_std2 = jnp.asarray(log_std, jnp.float32).reshape(n, a)
    if eps is None:
        eps2 = jnp.zeros((n, a), jnp.float32)
    else:
        eps2 = jnp.asarray(eps, jnp.float32).reshape(n, a)

    tile_n = min(int(tile_rows), _round_up(n, 8))
    n_pad = _round_up(n, tile_n)
    if n_pad != n:
        pad = ((0, n_pad - n), (0, 0))
        mean2 = jnp.pad(mean2, pad)
        log_std2 = jnp.pad(log_std2, pad)
        eps2 = jnp.pad(eps2, pad)

    kernel = functools.partial(
        _tanh_gaussian_kernel,
        log_std_min=float(log_std_min), log_std_max=float(log_std_max),
        deterministic=bool(deterministic), no_tanh=bool(no_tanh))

    action, lp = pl.pallas_call(
        kernel,
        out_shape=(jax.ShapeDtypeStruct((n_pad, a), jnp.float32),
                   jax.ShapeDtypeStruct((n_pad, 1), jnp.float32)),
        grid=(n_pad // tile_n,),
        in_specs=[
            pl.BlockSpec((tile_n, a), lambda i: (i, 0)),
            pl.BlockSpec((tile_n, a), lambda i: (i, 0)),
            pl.BlockSpec((tile_n, a), lambda i: (i, 0)),
        ],
        out_specs=(
            pl.BlockSpec((tile_n, a), lambda i: (i, 0)),
            pl.BlockSpec((tile_n, 1), lambda i: (i, 0)),
        ),
        compiler_params=pltpu.CompilerParams(
            dimension_semantics=("parallel",)),
    )(mean2, log_std2, eps2)

    action = action[:n].reshape(orig_shape)
    log_prob = lp[:n, 0].reshape(lead)
    return action, log_prob


# ---------------------------------------------------------------------------
# pure-JAX reference (same formulas, no Pallas)
# ---------------------------------------------------------------------------
def tanh_gaussian_forward_ref(mean, log_std, eps=None, *, deterministic=False,
                              no_tanh=False, log_std_min=-20.0, log_std_max=2.0):
    mean = jnp.asarray(mean, jnp.float32)
    log_std = jnp.asarray(log_std, jnp.float32)
    eps = jnp.zeros_like(mean) if eps is None else jnp.asarray(eps, jnp.float32)
    action, lp = _forward_math(mean, log_std, eps,
                               log_std_min=log_std_min, log_std_max=log_std_max,
                               deterministic=deterministic, no_tanh=no_tanh)
    return action, jnp.sum(lp, axis=-1)


# ---------------------------------------------------------------------------
if __name__ == "__main__":
    key = jax.random.PRNGKey(0)
    k_mean, k_std, k_eps, k_mean2, k_std2, k_eps2 = jax.random.split(key, 6)

    def check(got, want, name):
        for g, w in zip(got, want):
            np.testing.assert_allclose(np.asarray(g), np.asarray(w),
                                       rtol=1e-5, atol=1e-5, err_msg=name)

    # --- small case: batch=2, action_dim=4 ------------------------------------
    B, A = 2, 4
    mean = jax.random.normal(k_mean, (B, A), jnp.float32)
    log_std = 2.0 * jax.random.normal(k_std, (B, A), jnp.float32)   # exercises clamp
    eps = jax.random.normal(k_eps, (B, A), jnp.float32)

    out = jax.block_until_ready(tanh_gaussian_forward(mean, log_std, eps))
    ref = tanh_gaussian_forward_ref(mean, log_std, eps)
    assert out[0].shape == (B, A) and out[1].shape == (B,)
    check(out, ref, "stochastic tanh")

    out_d = jax.block_until_ready(
        tanh_gaussian_forward(mean, log_std, deterministic=True))
    ref_d = tanh_gaussian_forward_ref(mean, log_std, deterministic=True)
    check(out_d, ref_d, "deterministic tanh")

    out_nt = jax.block_until_ready(
        tanh_gaussian_forward(mean, log_std, eps, no_tanh=True))
    ref_nt = tanh_gaussian_forward_ref(mean, log_std, eps, no_tanh=True)
    check(out_nt, ref_nt, "stochastic no_tanh")

    # --- larger batch with extra leading dims (exercises multi-tile grid) -----
    B2, R2, A2 = 16, 40, 6       # flattened rows = 640 -> 5 tiles of 128
    mean_b = jax.random.normal(k_mean2, (B2, R2, A2), jnp.float32)
    log_std_b = 0.5 * jax.random.normal(k_std2, (B2, R2, A2), jnp.float32)
    eps_b = jax.random.normal(k_eps2, (B2, R2, A2), jnp.float32)

    out_b = jax.block_until_ready(tanh_gaussian_forward(mean_b, log_std_b, eps_b))
    ref_b = tanh_gaussian_forward_ref(mean_b, log_std_b, eps_b)
    assert out_b[0].shape == (B2, R2, A2) and out_b[1].shape == (B2, R2)
    check(out_b, ref_b, "stochastic tanh, batched leading dims")

    print("KERNEL_OK")
</pallas_src>

<mosaic_0001>
module attributes {stable_mosaic.version = 11 : i64} {
  func.func @_tanh_gaussian_kernel(%arg0: i32, %arg1: memref<8x4xf32, #tpu.memory_space<vmem>>, %arg2: memref<8x4xf32, #tpu.memory_space<vmem>>, %arg3: memref<8x4xf32, #tpu.memory_space<vmem>>, %arg4: memref<8x4xf32, #tpu.memory_space<vmem>>, %arg5: memref<8x1xf32, #tpu.memory_space<vmem>>) attributes {dimension_semantics = [#tpu.dimension_semantics<parallel>], iteration_bounds = array<i64: 1>, scalar_prefetch = 0 : i64, scratch_operands = 0 : i64, tpu.core_type = #tpu.core_type<tc>, window_params = [{transform_indices = @transform_0, window_bounds = array<i64: 8, 4>}, {transform_indices = @transform_1, window_bounds = array<i64: 8, 4>}, {transform_indices = @transform_2, window_bounds = array<i64: 8, 4>}, {transform_indices = @transform_3, window_bounds = array<i64: 8, 4>}, {transform_indices = @transform_4, window_bounds = array<i64: 8, 1>}]} {
    %c0 = arith.constant 0 : index
    %c0_0 = arith.constant 0 : index
    %0 = vector.load %arg1[%c0, %c0_0] : memref<8x4xf32, #tpu.memory_space<vmem>>, vector<8x4xf32>
    %c0_1 = arith.constant 0 : index
    %c0_2 = arith.constant 0 : index
    %1 = vector.load %arg2[%c0_1, %c0_2] : memref<8x4xf32, #tpu.memory_space<vmem>>, vector<8x4xf32>
    %c0_3 = arith.constant 0 : index
    %c0_4 = arith.constant 0 : index
    %2 = vector.load %arg3[%c0_3, %c0_4] : memref<8x4xf32, #tpu.memory_space<vmem>>, vector<8x4xf32>
    %cst = arith.constant -2.000000e+01 : f32
    %cst_5 = arith.constant 2.000000e+00 : f32
    %3 = vector.broadcast %cst : f32 to vector<8x4xf32>
    %4 = arith.maximumf %3, %1 : vector<8x4xf32>
    %5 = vector.broadcast %cst_5 : f32 to vector<8x4xf32>
    %6 = arith.minimumf %5, %4 : vector<8x4xf32>
    %7 = math.exp %6 : vector<8x4xf32>
    %8 = arith.mulf %7, %2 : vector<8x4xf32>
    %9 = arith.addf %0, %8 : vector<8x4xf32>
    %cst_6 = arith.constant -5.000000e-01 : f32
    %10 = vector.broadcast %cst_6 : f32 to vector<8x4xf32>
    %11 = arith.mulf %10, %2 : vector<8x4xf32>
    %12 = arith.mulf %11, %2 : vector<8x4xf32>
    %13 = arith.subf %12, %6 : vector<8x4xf32>
    %cst_7 = arith.constant 0.918938517 : f32
    %14 = vector.broadcast %cst_7 : f32 to vector<8x4xf32>
    %15 = arith.subf %13, %14 : vector<8x4xf32>
    %16 = math.tanh %9 : vector<8x4xf32>
    %cst_8 = arith.constant -2.000000e+00 : f32
    %17 = vector.broadcast %cst_8 : f32 to vector<8x4xf32>
    %18 = arith.mulf %17, %9 : vector<8x4xf32>
    %cst_9 = arith.constant 0.000000e+00 : f32
    %19 = vector.broadcast %cst_9 : f32 to vector<8x4xf32>
    %20 = arith.maximumf %18, %19 : vector<8x4xf32>
    %21 = math.absf %9 : vector<8x4xf32>
    %cst_10 = arith.constant -2.000000e+00 : f32
    %22 = vector.broadcast %cst_10 : f32 to vector<8x4xf32>
    %23 = arith.mulf %22, %21 : vector<8x4xf32>
    %24 = math.exp %23 : vector<8x4xf32>
    %cst_11 = arith.constant 1.000000e+00 : f32
    %25 = vector.broadcast %cst_11 : f32 to vector<8x4xf32>
    %26 = arith.addf %25, %24 : vector<8x4xf32>
    %27 = math.log %26 : vector<8x4xf32>
    %28 = arith.addf %20, %27 : vector<8x4xf32>
    %cst_12 = arith.constant 0.693147182 : f32
    %29 = vector.broadcast %cst_12 : f32 to vector<8x4xf32>
    %30 = arith.subf %29, %9 : vector<8x4xf32>
    %31 = arith.subf %30, %28 : vector<8x4xf32>
    %cst_13 = arith.constant 2.000000e+00 : f32
    %32 = vector.broadcast %cst_13 : f32 to vector<8x4xf32>
    %33 = arith.mulf %32, %31 : vector<8x4xf32>
    %34 = arith.subf %15, %33 : vector<8x4xf32>
    %c0_14 = arith.constant 0 : index
    %c0_15 = arith.constant 0 : index
    %35 = vector.load %arg4[%c0_14, %c0_15] : memref<8x4xf32, #tpu.memory_space<vmem>>, vector<8x4xf32>
    tpu.vector_store %arg4[%c0_14, %c0_15], %16 {strides = array<i32>} : memref<8x4xf32, #tpu.memory_space<vmem>>, vector<8x4xf32>,
    %cst_16 = arith.constant dense<0.000000e+00> : vector<8xf32>
    %36 = vector.multi_reduction <add>, %34, %cst_16 [1] : vector<8x4xf32> to vector<8xf32>
    %37 = vector.shape_cast %36 : vector<8xf32> to vector<8x1xf32>
    %c0_17 = arith.constant 0 : index
    %c0_18 = arith.constant 0 : index
    %38 = vector.load %arg5[%c0_17, %c0_18] : memref<8x1xf32, #tpu.memory_space<vmem>>, vector<8x1xf32>
    tpu.vector_store %arg5[%c0_17, %c0_18], %37 {strides = array<i32>} : memref<8x1xf32, #tpu.memory_space<vmem>>, vector<8x1xf32>,
    return
  }
  func.func @transform_0(%arg0: i32) -> (i32, i32) {
    %c0_i32 = arith.constant 0 : i32
    %c0_i32_0 = arith.constant 0 : i32
    return %arg0, %c0_i32 : i32, i32
  }
  func.func @transform_1(%arg0: i32) -> (i32, i32) {
    %c0_i32 = arith.constant 0 : i32
    %c0_i32_0 = arith.constant 0 : i32
    return %arg0, %c0_i32 : i32, i32
  }
  func.func @transform_2(%arg0: i32) -> (i32, i32) {
    %c0_i32 = arith.constant 0 : i32
    %c0_i32_0 = arith.constant 0 : i32
    return %arg0, %c0_i32 : i32, i32
  }
  func.func @transform_3(%arg0: i32) -> (i32, i32) {
    %c0_i32 = arith.constant 0 : i32
    %c0_i32_0 = arith.constant 0 : i32
    return %arg0, %c0_i32 : i32, i32
  }
  func.func @transform_4(%arg0: i32) -> (i32, i32) {
    %c0_i32 = arith.constant 0 : i32
    %c0_i32_0 = arith.constant 0 : i32
    return %arg0, %c0_i32 : i32, i32
  }
}

</mosaic_0001>

<llo_original>
// kernel: tpu_custom_call.1
$region0: #{tpu_custom_call.1}
  #allocation0 [shape = 'u32[]', space=smem, size = 0x4, offset = 0x4, fixed_abs, tag = 'smem constant byte address 0x4 - core index']
  #allocation1 [shape = 'u32[144,128]{1,0:T(1,128)}', space=vmem, size = 0x12000, scoped, tag = 'internal scratch']
  %s0 = inlined_call_operand.vmem [shape: f32[8,4], index: 0, kind: input, shape index: {}]
  %s1 = inlined_call_operand.vmem [shape: f32[8,4], index: 1, kind: input, shape index: {}]
  %s2 = inlined_call_operand.vmem [shape: f32[8,4], index: 2, kind: input, shape index: {}]
  %s3 = inlined_call_operand.vmem [shape: f32[8,4], index: 3, kind: output, shape index: {0}]
  %s4 = inlined_call_operand.vmem [shape: f32[8,1], index: 4, kind: output, shape index: {1}]
  %5 = xla_tuple %s3, %s4
  %s6 = sld [smem:[#allocation0]]
  $region30: #{tpu_custom_call.1} parent=0
    _
  %s8 = ssub.s32 1, %s6
  %s9 = scalar_select 0, %s8, %s6
  // Predicated region
  $region2: #{tpu_custom_call.1} parent=0 // pred_check
    _
  $region3: #{tpu_custom_call.1} parent=0 // pred_check_branch
    %11 = sbr.rel (0) target = $region5
  $region4: #{tpu_custom_call.1} parent=0 // pred_region
    _
  $region5: #{tpu_custom_call.1} parent=0 // pred_fallthru
    _
  // Predicated region
  $region6: #{tpu_custom_call.1} parent=0 // pred_check
    _
  $region7: #{tpu_custom_call.1} parent=0 // pred_check_branch
    %13 = sbr.rel (0) target = $region9
  $region8: #{tpu_custom_call.1} parent=0 // pred_region
    _
  $region9: #{tpu_custom_call.1} parent=0 // pred_fallthru
    _
  // Predicated region
  $region10: #{tpu_custom_call.1} parent=0 // pred_check
    _
  $region11: #{tpu_custom_call.1} parent=0 // pred_check_branch
    %15 = sbr.rel (0) target = $region13
  $region12: #{tpu_custom_call.1} parent=0 // pred_region
    _
  $region13: #{tpu_custom_call.1} parent=0 // pred_fallthru
    _
  %v16 = vld [vmem:[%s0] sm:$0xff]
  %v17 = vld [vmem:[%s1] sm:$0xff]
  %v18 = vld [vmem:[%s2] sm:$0xff]
  %v19 = vmax.f32 %v17, -20.0
  %v20 = vmin.f32 %v19, 2.0
  %v21 = vmul.f32 %v20, 1.442695
  %v22 = vpow.pop %v21
  %v23 = vmul.f32 %v22, %v18
  %v24 = vadd.f32 %v16, %v23
  %v25 = vmul.f32 %v18, -0.5
  %v26 = vmul.f32 %v25, %v18
  %v27 = vsub.f32 %v26, %v20
  %v28 = vsub.f32 %v27, 0.9189385
  %v29 = vtanh.pop %v24
  %v30 = vmul.f32 %v24, -2.0
  %v31 = vmax.f32 %v30, 0.0
  %v32 = vand.u32 2147483647, %v24
  %v33 = vmul.f32 %v32, -2.0
  %v34 = vmul.f32 %v33, 1.442695
  %v35 = vpow.pop %v34
  %v36 = vadd.f32 %v35, 1.0
  %v37 = vlog2.pop %v36
  %v38 = vmul.f32 %v37, 0.6931472
  %v39 = vadd.f32 %v31, %v38
  %v40 = vsub.f32 0.6931472, %v24
  %v41 = vsub.f32 %v40, %v39
  %v42 = vmul.f32 %v41, 2.0
  %v43 = vsub.f32 %v28, %v42
  %vm44 = vcmask 31744
  %45 = vst.msk [vmem:[%s3] sm:$0xff] %vm44, %v29
  %v46 = vsel %vm44, %v43, 0.0
  %47 = vadd.xlane.f32.xlu0 %v46
  %v48 = vpop.xlane.xlu0 %47
  %vm49 = vcmask 7168
  %50 = vst.msk [vmem:[%s4] sm:$0xff] %vm49, %v48
  // Predicated region
  $region14: #{tpu_custom_call.1} parent=0 // pred_check
    _
  $region15: #{tpu_custom_call.1} parent=0 // pred_check_branch
    %52 = sbr.rel (0) target = $region17
  $region16: #{tpu_custom_call.1} parent=0 // pred_region
    _
  $region17: #{tpu_custom_call.1} parent=0 // pred_fallthru
    _
  // Predicated region
  $region18: #{tpu_custom_call.1} parent=0 // pred_check
    _
  $region19: #{tpu_custom_call.1} parent=0 // pred_check_branch
    %54 = sbr.rel (0) target = $region21
  $region20: #{tpu_custom_call.1} parent=0 // pred_region
    _
  $region21: #{tpu_custom_call.1} parent=0 // pred_fallthru
    _
  // Predicated region
  $region22: #{tpu_custom_call.1} parent=0 // pred_check
    _
  $region23: #{tpu_custom_call.1} parent=0 // pred_check_branch
    %56 = sbr.rel (0) target = $region25
  $region24: #{tpu_custom_call.1} parent=0 // pred_region
    _
  $region25: #{tpu_custom_call.1} parent=0 // pred_fallthru
    _
  // Predicated region
  $region26: #{tpu_custom_call.1} parent=0 // pred_check
    _
  $region27: #{tpu_custom_call.1} parent=0 // pred_check_branch
    %58 = sbr.rel (0) target = $region29
  $region28: #{tpu_custom_call.1} parent=0 // pred_region
    _
  $region29: #{tpu_custom_call.1} parent=0 // pred_fallthru
    _

</llo_original>
